<compile_context>
chip_gen: v6e
topology: v6e:2x2x1
jax: 0.10.0
libtpu: 0.0.40
codegen_flags: <defaults>
</compile_context>

<pallas_src>
import jax
import jax.numpy as jnp
from jax.experimental import pallas as pl
from jax.experimental.pallas import tpu as pltpu


def _scalar_kernel(c_ref, o_ref):
    # Single SMEM scalar move: the entire "forward pass".
    o_ref[0] = c_ref[0]


def _scalar_forward_impl(constant: jax.Array) -> jax.Array:
    out = pl.pallas_call(
        _scalar_kernel,
        out_shape=jax.ShapeDtypeStruct((1,), jnp.float32),
        in_specs=[pl.BlockSpec(memory_space=pltpu.SMEM)],
        out_specs=pl.BlockSpec(memory_space=pltpu.SMEM),
        # Advise XLA the call is effectively free (4 B in + 4 B out).
        cost_estimate=pl.CostEstimate(flops=0, transcendentals=0, bytes_accessed=8),
    )(constant)
    # Single metadata-only reshape to match PyTorch's 0-d return.
    return out.reshape(())


@jax.custom_vjp
def scalar_forward(constant: jax.Array) -> jax.Array:
    """Pallas equivalent of Scalar.forward(): returns the parameter value.

    Args:
      constant: float32[1] array (the learnable parameter, kernel-native layout).
    Returns:
      0-d float32 array equal to `constant[0]`.
    """
    return _scalar_forward_impl(constant)


def _scalar_fwd(constant):
    return _scalar_forward_impl(constant), None


def _scalar_bwd(_, g):
    # Identity backward: d(out)/d(constant) == 1.
    return (jnp.reshape(g, (1,)).astype(jnp.float32),)


scalar_forward.defvjp(_scalar_fwd, _scalar_bwd)


if __name__ == "__main__":
    # Deterministic parameter initialization (mirrors
    # nn.Parameter(torch.tensor(init_value, dtype=torch.float32))).
    key = jax.random.PRNGKey(0)  # unused: the module takes no runtime inputs
    init_value = 3.14159
    constant = jnp.full((1,), init_value, dtype=jnp.float32)

    result = jax.block_until_ready(scalar_forward(constant))

    assert result.shape == ()
    assert result.dtype == jnp.float32
    assert jnp.allclose(result, jnp.float32(init_value))

    # Gradient flows through the custom_vjp identity backward (parameter is
    # learnable in the original module).
    grad = jax.block_until_ready(
        jax.grad(lambda c: scalar_forward(c) * 2.0)(constant)
    )
    assert grad.shape == (1,)
    assert jnp.allclose(grad, jnp.float32(2.0))

    print("KERNEL_OK")
</pallas_src>

<mosaic_0001>
module attributes {stable_mosaic.version = 11 : i64} {
  func.func @_scalar_kernel(%arg0: memref<1xf32, #tpu.memory_space<smem>>, %arg1: memref<1xf32, #tpu.memory_space<smem>>) attributes {dimension_semantics = [], scalar_prefetch = 0 : i64, scratch_operands = 0 : i64, tpu.core_type = #tpu.core_type<tc>} {
    %c0 = arith.constant 0 : index
    %0 = memref.load %arg0[%c0] : memref<1xf32, #tpu.memory_space<smem>>
    %c0_0 = arith.constant 0 : index
    %1 = memref.load %arg1[%c0_0] : memref<1xf32, #tpu.memory_space<smem>>
    memref.store %0, %arg1[%c0_0] : memref<1xf32, #tpu.memory_space<smem>>
    return
  }
}

</mosaic_0001>

<llo_original>
// kernel: tpu_custom_call.1
$region0: #{tpu_custom_call.1}
  #allocation0 [shape = 'u32[]', space=smem, size = 0x4, offset = 0x4, fixed_abs, tag = 'smem constant byte address 0x4 - core index']
  #allocation1 [shape = 'u32[144,128]{1,0:T(1,128)}', space=vmem, size = 0x12000, scoped, tag = 'internal scratch']
  #allocation2 [shape = 'f32[1]{0:T(128)S(6)}', space=smem, size = 0x200, scoped, tag = 'scoped memory for tpu_custom_call.1']
  %s0 = inlined_call_operand.<no memory space> [shape: f32[1], index: 0, kind: input, shape index: {}]
  %s1 = inlined_call_operand.hbm [shape: f32[1], index: 1, kind: output, shape index: {}]
  %s2 = sld [smem:[#allocation0]]
  $region14: #{tpu_custom_call.1} parent=0
    _
  %s4 = ssub.s32 1, %s2
  %s5 = scalar_select 0, %s4, %s2
  %6 = sst [smem:[#allocation2]] %s0
  $region1: #{tpu_custom_call.1} parent=0
    #allocation3 [shape = 'u8[512]{0}', space=smem, size = 0x200, scoped, tag = 'output window, operand 0, single buffered']
    #allocation4 [shape = 's32[1]{0}', space=sflag, size = 0x4, scoped, tag = 'scoped memory for tpu_custom_call.1']
    %7 = vsyncpa [#allocation4], 0
    // Predicated region
    $region2: #{tpu_custom_call.1} parent=1 // pred_check
      _
    $region3: #{tpu_custom_call.1} parent=1 // pred_check_branch
      %9 = sbr.rel (0) target = $region5
    $region4: #{tpu_custom_call.1} parent=1 // pred_region
      _
    $region5: #{tpu_custom_call.1} parent=1 // pred_fallthru
      _
    %s10 = sld [smem:[#allocation2]]
    %s11 = scalar_lea.smem [#allocation3], 0
    %12 = sst [smem:[%s11]] %s10
    // Predicated region
    $region6: #{tpu_custom_call.1} parent=1 // pred_check
      _
    $region7: #{tpu_custom_call.1} parent=1 // pred_check_branch
      %14 = sbr.rel (0) target = $region9
    $region8: #{tpu_custom_call.1} parent=1 // pred_region
      %s16 = ssub.s32 16, 16
      %17 = vsyncadd [#allocation4], %s16
      %20 = dma.smem_to_hbm [#allocation3], 16, %s1, [#allocation4]
    $region9: #{tpu_custom_call.1} parent=1 // pred_fallthru
      _
    // Predicated region
    $region10: #{tpu_custom_call.1} parent=1 // pred_check
      _
    $region11: #{tpu_custom_call.1} parent=1 // pred_check_branch
      %22 = sbr.rel (0) target = $region13
    $region12: #{tpu_custom_call.1} parent=1 // pred_region
      %23 = dma.done [#allocation4], 16
    $region13: #{tpu_custom_call.1} parent=1 // pred_fallthru
      _
    %24 = sfence
    %25 = vsyncpa [#allocation4], 1

</llo_original>
